<compile_context>
chip_gen: v7x
topology: tpu7x:2x2x1
jax: 0.10.0
libtpu: 0.0.40
codegen_flags: <defaults>
</compile_context>

<pallas_src>
import jax
import jax.numpy as jnp
from jax import lax
from jax.experimental import pallas as pl
from jax.experimental.pallas import tpu as pltpu


def _cdiv(a: int, b: int) -> int:
    return (a + b - 1) // b


def _round_up(n: int, m: int) -> int:
    return _cdiv(n, m) * m


# Contract the last dim of both operands (A @ B^T form), as used by the
# official Pallas TPU flash-attention kernel.
_TRANS_B_DIMS = (((1,), (1,)), ((), ()))


def anet_kernel(x_ref, w1_ref, b1_ref, w2t_ref, b2t_ref, o_ref):
    # Layer 1 (row-major): (TILE_B, s_dim) @ (s_dim, H_PAD) -> (TILE_B, H_PAD)
    h = jnp.dot(x_ref[...], w1_ref[...], preferred_element_type=jnp.float32)
    h = jnp.maximum(h + b1_ref[...], 0.0)
    # Layer 2 directly in transposed (feature, batch) form:
    #   yt[a, b] = sum_k w2t[a, k] * h[b, k]
    # -> (A_PAD, TILE_B), lane dim = batch (lane-dense output).
    yt = lax.dot_general(w2t_ref[...], h, _TRANS_B_DIMS,
                         preferred_element_type=jnp.float32)
    yt = yt + b2t_ref[...]          # (A_PAD, 1) broadcast across lanes
    # tanh (EUP) then scale by the action bound 2.
    o_ref[...] = jnp.tanh(yt) * 2.0


def anet_forward(x, w1, b1, w2, b2, *, max_tile_b: int = 4096):
    """Pallas wrapper.

    x:  (B, s_dim) f32
    w1: (s_dim, hidden) f32   (transposed vs. PyTorch's (out, in))
    b1: (hidden,) f32
    w2: (hidden, a_dim) f32
    b2: (a_dim,) f32
    Returns (B, a_dim) f32.
    """
    B, s_dim = x.shape
    hidden = w1.shape[1]
    a_dim = w2.shape[1]

    H_PAD = _round_up(hidden, 8)   # 30 -> 32
    A_PAD = _round_up(a_dim, 8)    # compact 8-sublane output slab

    # Batch tile: one block for tiny batches (full-dim blocks are legal);
    # otherwise a multiple of 128 sized to minimize overshoot, with >= 2 grid
    # steps so both v7x TensorCores get work.
    if B <= 128:
        TILE_B = B
    else:
        n_tiles = max(_cdiv(B, max_tile_b), 2)
        TILE_B = _round_up(_cdiv(B, n_tiles), 128)
    grid = (_cdiv(B, TILE_B),)

    f32 = jnp.float32
    x = x.astype(f32)                     # fed directly, no pad-copy
    w1p = jnp.zeros((s_dim, H_PAD), f32).at[:, :hidden].set(w1.astype(f32))
    b1p = jnp.zeros((1, H_PAD), f32).at[0, :hidden].set(b1.astype(f32))
    w2t = jnp.zeros((A_PAD, H_PAD), f32).at[:a_dim, :hidden].set(w2.astype(f32).T)
    b2t = jnp.zeros((A_PAD, 1), f32).at[:a_dim, 0].set(b2.astype(f32))

    cost = pl.CostEstimate(
        flops=2 * B * (s_dim * hidden + hidden * a_dim),
        transcendentals=B * a_dim,
        bytes_accessed=4 * (B * s_dim + B * A_PAD
                            + s_dim * H_PAD + A_PAD * H_PAD + H_PAD + A_PAD),
    )

    out_t = pl.pallas_call(
        anet_kernel,
        out_shape=jax.ShapeDtypeStruct((A_PAD, B), f32),
        grid=grid,
        in_specs=[
            # x streams over the batch grid axis; last dim = full s_dim.
            pl.BlockSpec((TILE_B, s_dim), lambda i: (i, 0)),
            # Weights / biases: constant index_map -> stay resident in VMEM.
            pl.BlockSpec((s_dim, H_PAD), lambda i: (0, 0)),
            pl.BlockSpec((1, H_PAD), lambda i: (0, 0)),
            pl.BlockSpec((A_PAD, H_PAD), lambda i: (0, 0)),
            pl.BlockSpec((A_PAD, 1), lambda i: (0, 0)),
        ],
        # Transposed output: 8 sublanes x TILE_B lanes, lane-dense stores.
        out_specs=pl.BlockSpec((A_PAD, TILE_B), lambda i: (0, i)),
        compiler_params=pltpu.CompilerParams(
            dimension_semantics=("parallel",),
        ),
        cost_estimate=cost,
    )(x, w1p, b1p, w2t, b2t)

    # (A_PAD, B) -> (B, a_dim): drop padded feature rows, transpose the tiny
    # (a_dim, B) result back to the PyTorch layout.
    return out_t[:a_dim, :].T


def init_params(key, s_dim, a_dim, hidden=30):
    """Deterministic synthetic init matching the module's shapes.
    Weights ~ N(0, 0.1) as in the PyTorch __init__; biases ~ small uniform."""
    k1, k2, k3, k4 = jax.random.split(key, 4)
    w1 = 0.1 * jax.random.normal(k1, (s_dim, hidden), dtype=jnp.float32)
    b1 = 0.01 * jax.random.uniform(k2, (hidden,), dtype=jnp.float32)
    w2 = 0.1 * jax.random.normal(k3, (hidden, a_dim), dtype=jnp.float32)
    b2 = 0.01 * jax.random.uniform(k4, (a_dim,), dtype=jnp.float32)
    return w1, b1, w2, b2


def anet_ref(x, w1, b1, w2, b2):
    h = jnp.maximum(x @ w1 + b1, 0.0)
    return jnp.tanh(h @ w2 + b2) * 2.0


if __name__ == "__main__":
    key = jax.random.PRNGKey(0)
    kx, kp, kx2 = jax.random.split(key, 3)

    # Small shapes consistent with a typical DDPG env (e.g. Pendulum-like).
    s_dim, a_dim = 3, 1
    w1, b1, w2, b2 = init_params(kp, s_dim, a_dim)

    # Case 1: tiny batch, single grid step.
    x_small = jax.random.normal(kx, (4, s_dim), dtype=jnp.float32)
    out_small = jax.block_until_ready(anet_forward(x_small, w1, b1, w2, b2))
    ref_small = anet_ref(x_small, w1, b1, w2, b2)
    assert out_small.shape == (4, a_dim)
    assert jnp.allclose(out_small, ref_small, atol=1e-5, rtol=1e-5), (
        out_small, ref_small)

    # Case 2: multi-tile batch with a ragged last block (exercises the
    # cdiv grid + masked overhang path).
    x_big = jax.random.normal(kx2, (300, s_dim), dtype=jnp.float32)
    out_big = jax.block_until_ready(anet_forward(x_big, w1, b1, w2, b2))
    ref_big = anet_ref(x_big, w1, b1, w2, b2)
    assert out_big.shape == (300, a_dim)
    assert jnp.allclose(out_big, ref_big, atol=1e-5, rtol=1e-5)

    print("KERNEL_OK")
</pallas_src>

<mosaic_0001>
module attributes {stable_mosaic.version = 11 : i64} {
  func.func @anet_kernel(%arg0: i32, %arg1: memref<4x3xf32, #tpu.memory_space<vmem>>, %arg2: memref<3x32xf32, #tpu.memory_space<vmem>>, %arg3: memref<1x32xf32, #tpu.memory_space<vmem>>, %arg4: memref<8x32xf32, #tpu.memory_space<vmem>>, %arg5: memref<8x1xf32, #tpu.memory_space<vmem>>, %arg6: memref<8x4xf32, #tpu.memory_space<vmem>>) attributes {dimension_semantics = [#tpu.dimension_semantics<parallel>], iteration_bounds = array<i64: 1>, scalar_prefetch = 0 : i64, scratch_operands = 0 : i64, tpu.core_type = #tpu.core_type<tc>, window_params = [{transform_indices = @transform_0, window_bounds = array<i64: 4, 3>}, {pipeline_mode = #tpu.pipeline_mode<synchronous>, transform_indices = @transform_1, window_bounds = array<i64: 3, 32>}, {pipeline_mode = #tpu.pipeline_mode<synchronous>, transform_indices = @transform_2, window_bounds = array<i64: 1, 32>}, {pipeline_mode = #tpu.pipeline_mode<synchronous>, transform_indices = @transform_3, window_bounds = array<i64: 8, 32>}, {pipeline_mode = #tpu.pipeline_mode<synchronous>, transform_indices = @transform_4, window_bounds = array<i64: 8, 1>}, {transform_indices = @transform_5, window_bounds = array<i64: 8, 4>}]} {
    %c0 = arith.constant 0 : index
    %c0_0 = arith.constant 0 : index
    %0 = vector.load %arg1[%c0, %c0_0] : memref<4x3xf32, #tpu.memory_space<vmem>>, vector<4x3xf32>
    %c0_1 = arith.constant 0 : index
    %c0_2 = arith.constant 0 : index
    %1 = vector.load %arg2[%c0_1, %c0_2] : memref<3x32xf32, #tpu.memory_space<vmem>>, vector<3x32xf32>
    %cst = arith.constant dense<0.000000e+00> : vector<4x32xf32>
    %2 = tpu.matmul %0, %1, %cst {dimension_numbers = #tpu.dot_dimension_numbers<[1], [0], [0], [1], [0, 0, 1, 1], [], []>} : vector<4x3xf32>, vector<3x32xf32>, vector<4x32xf32> -> vector<4x32xf32>
    %c0_3 = arith.constant 0 : index
    %c0_4 = arith.constant 0 : index
    %3 = vector.load %arg3[%c0_3, %c0_4] : memref<1x32xf32, #tpu.memory_space<vmem>>, vector<1x32xf32>
    %4 = vector.broadcast %3 : vector<1x32xf32> to vector<4x32xf32>
    %5 = arith.addf %2, %4 : vector<4x32xf32>
    %cst_5 = arith.constant 0.000000e+00 : f32
    %6 = vector.broadcast %cst_5 : f32 to vector<4x32xf32>
    %7 = arith.maximumf %5, %6 : vector<4x32xf32>
    %c0_6 = arith.constant 0 : index
    %c0_7 = arith.constant 0 : index
    %8 = vector.load %arg4[%c0_6, %c0_7] : memref<8x32xf32, #tpu.memory_space<vmem>>, vector<8x32xf32>
    %cst_8 = arith.constant dense<0.000000e+00> : vector<8x4xf32>
    %9 = tpu.matmul %8, %7, %cst_8 {dimension_numbers = #tpu.dot_dimension_numbers<[1], [1], [0], [0], [0, 0, 1, 0], [], []>} : vector<8x32xf32>, vector<4x32xf32>, vector<8x4xf32> -> vector<8x4xf32>
    %c0_9 = arith.constant 0 : index
    %c0_10 = arith.constant 0 : index
    %10 = vector.load %arg5[%c0_9, %c0_10] : memref<8x1xf32, #tpu.memory_space<vmem>>, vector<8x1xf32>
    %11 = vector.broadcast %10 : vector<8x1xf32> to vector<8x4xf32>
    %12 = arith.addf %9, %11 : vector<8x4xf32>
    %13 = math.tanh %12 : vector<8x4xf32>
    %cst_11 = arith.constant 2.000000e+00 : f32
    %14 = vector.broadcast %cst_11 : f32 to vector<8x4xf32>
    %15 = arith.mulf %13, %14 : vector<8x4xf32>
    %c0_12 = arith.constant 0 : index
    %c0_13 = arith.constant 0 : index
    %16 = vector.load %arg6[%c0_12, %c0_13] : memref<8x4xf32, #tpu.memory_space<vmem>>, vector<8x4xf32>
    tpu.vector_store %arg6[%c0_12, %c0_13], %15 {strides = array<i32>} : memref<8x4xf32, #tpu.memory_space<vmem>>, vector<8x4xf32>,
    return
  }
  func.func @transform_0(%arg0: i32) -> (i32, i32) {
    %c0_i32 = arith.constant 0 : i32
    %c0_i32_0 = arith.constant 0 : i32
    return %arg0, %c0_i32 : i32, i32
  }
  func.func @transform_1(%arg0: i32) -> (i32, i32) {
    %c0_i32 = arith.constant 0 : i32
    %c0_i32_0 = arith.constant 0 : i32
    %c0_i32_1 = arith.constant 0 : i32
    return %c0_i32, %c0_i32_0 : i32, i32
  }
  func.func @transform_2(%arg0: i32) -> (i32, i32) {
    %c0_i32 = arith.constant 0 : i32
    %c0_i32_0 = arith.constant 0 : i32
    %c0_i32_1 = arith.constant 0 : i32
    return %c0_i32, %c0_i32_0 : i32, i32
  }
  func.func @transform_3(%arg0: i32) -> (i32, i32) {
    %c0_i32 = arith.constant 0 : i32
    %c0_i32_0 = arith.constant 0 : i32
    %c0_i32_1 = arith.constant 0 : i32
    return %c0_i32, %c0_i32_0 : i32, i32
  }
  func.func @transform_4(%arg0: i32) -> (i32, i32) {
    %c0_i32 = arith.constant 0 : i32
    %c0_i32_0 = arith.constant 0 : i32
    %c0_i32_1 = arith.constant 0 : i32
    return %c0_i32, %c0_i32_0 : i32, i32
  }
  func.func @transform_5(%arg0: i32) -> (i32, i32) {
    %c0_i32 = arith.constant 0 : i32
    %c0_i32_0 = arith.constant 0 : i32
    return %c0_i32, %arg0 : i32, i32
  }
}

</mosaic_0001>

<llo_original>
// kernel: tpu_custom_call.1
$region0: #{tpu_custom_call.1}
  #allocation0 [shape = 'u32[]', space=smem, size = 0x4, offset = 0x4, fixed_abs, tag = 'smem constant byte address 0x4 - core index']
  #allocation1 [shape = 'u32[144,128]{1,0:T(1,128)}', space=vmem, size = 0x12000, scoped, tag = 'internal scratch']
  %s0 = inlined_call_operand.vmem [shape: f32[4,3], index: 0, kind: input, shape index: {}]
  %s1 = inlined_call_operand.vmem [shape: f32[3,32], index: 1, kind: input, shape index: {}]
  %s2 = inlined_call_operand.hbm [shape: f32[1,32], index: 2, kind: input, shape index: {}]
  %s3 = inlined_call_operand.vmem [shape: f32[8,32], index: 3, kind: input, shape index: {}]
  %s4 = inlined_call_operand.vmem [shape: f32[8,1], index: 4, kind: input, shape index: {}]
  %s5 = inlined_call_operand.vmem [shape: f32[8,4], index: 5, kind: output, shape index: {}]
  %s6 = sld [smem:[#allocation0]]
  $region34: #{tpu_custom_call.1} parent=0
    _
  %s8 = ssub.s32 1, %s6
  %s9 = scalar_select 0, %s8, %s6
  $region1: #{tpu_custom_call.1} parent=0
    #allocation2 [shape = 'u8[512]{0}', space=vmem, size = 0x400, scoped, tag = 'input window, operand 2, single buffered']
    #allocation3 [shape = 's32[1]{0}', space=sflag, size = 0x4, scoped, tag = 'scoped memory for tpu_custom_call.1']
    %10 = vsyncpa [#allocation3], 0
    // Predicated region
    $region2: #{tpu_custom_call.1} parent=1 // pred_check
      _
    $region3: #{tpu_custom_call.1} parent=1 // pred_check_branch
      %12 = sbr.rel (0) target = $region5
    $region4: #{tpu_custom_call.1} parent=1 // pred_region
      _
    $region5: #{tpu_custom_call.1} parent=1 // pred_fallthru
      _
    // Predicated region
    $region6: #{tpu_custom_call.1} parent=1 // pred_check
      _
    $region7: #{tpu_custom_call.1} parent=1 // pred_check_branch
      %14 = sbr.rel (0) target = $region9
    $region8: #{tpu_custom_call.1} parent=1 // pred_region
      _
    $region9: #{tpu_custom_call.1} parent=1 // pred_fallthru
      _
    // Predicated region
    $region10: #{tpu_custom_call.1} parent=1 // pred_check
      _
    $region11: #{tpu_custom_call.1} parent=1 // pred_check_branch
      %16 = sbr.rel (0) target = $region13
    $region12: #{tpu_custom_call.1} parent=1 // pred_region
      %s18 = ssub.s32 16, 16
      %19 = vsyncadd [#allocation3], %s18
      %s21 = sshll.u32 [#allocation2], 4
      %s22 = int_to_ptr.vmem [resolvable:$true] %s21
      %24 = dma.hbm_to_vmem [thread:$0]  %s2, 16, %s22, [#allocation3]
    $region13: #{tpu_custom_call.1} parent=1 // pred_fallthru
      _
    // Predicated region
    $region14: #{tpu_custom_call.1} parent=1 // pred_check
      _
    $region15: #{tpu_custom_call.1} parent=1 // pred_check_branch
      %26 = sbr.rel (0) target = $region17
    $region16: #{tpu_custom_call.1} parent=1 // pred_region
      _
    $region17: #{tpu_custom_call.1} parent=1 // pred_fallthru
      _
    // Predicated region
    $region18: #{tpu_custom_call.1} parent=1 // pred_check
      _
    $region19: #{tpu_custom_call.1} parent=1 // pred_check_branch
      %28 = sbr.rel (0) target = $region21
    $region20: #{tpu_custom_call.1} parent=1 // pred_region
      _
    $region21: #{tpu_custom_call.1} parent=1 // pred_fallthru
      _
    // Predicated region
    $region22: #{tpu_custom_call.1} parent=1 // pred_check
      _
    $region23: #{tpu_custom_call.1} parent=1 // pred_check_branch
      %30 = sbr.rel (0) target = $region25
    $region24: #{tpu_custom_call.1} parent=1 // pred_region
      %31 = dma.done [#allocation3], 16
    $region25: #{tpu_custom_call.1} parent=1 // pred_fallthru
      _
    %v32 = vld [vmem:[%s0] sm:$0xf]
    %v33 = vld [vmem:[%s1] sm:$0x7]
    %v34 = vld [vmem:[#allocation2] sm:$0x1]
    %v36 = vlaneseq
    %v37 = vshrl.u32 %v36, 7
    %v38 = vsub.s32 0, %v37
    %v39 = vrot.slane %v34, %v38
    %vm41 = vcmask 23552
    %v43 = vsel %vm41, %v32, 0
    %vm45 = vcmask 1042432
    %v47 = vsel %vm45, %v33, 0
    %49 = vmatprep.subr.mxu0 0.0
    %50 = vmatpush1.msra.mxu0 %v47
    %51 = vmatprep.subr.mxu0 0.0
    %52 = vmatpush1.msra.mxu0 0.0
    %53 = vmatprep.subr.mxu0 0.0
    %54 = vmatpush1.msra.mxu0 0.0
    %55 = vmatprep.subr.mxu0 0.0
    %56 = vmatpush1.msra.mxu0 0.0
    %57 = vmatprep.subr.mxu0 0.0
    %58 = vmatpush1.msra.mxu0 0.0
    %59 = vmatprep.subr.mxu0 0.0
    %60 = vmatpush1.msra.mxu0 0.0
    %61 = vmatprep.subr.mxu0 0.0
    %62 = vmatpush1.msra.mxu0 0.0
    %63 = vmatprep.subr.mxu0 0.0
    %64 = vmatpush1.msra.mxu0 0.0
    %65 = vmatprep.subr.mxu0 0.0
    %66 = vmatpush1.msra.mxu0 0.0
    %67 = vmatprep.subr.mxu0 0.0
    %68 = vmatpush1.msra.mxu0 0.0
    %69 = vmatprep.subr.mxu0 0.0
    %70 = vmatpush1.msra.mxu0 0.0
    %71 = vmatprep.subr.mxu0 0.0
    %72 = vmatpush1.msra.mxu0 0.0
    %73 = vmatprep.subr.mxu0 0.0
    %74 = vmatpush1.msra.mxu0 0.0
    %75 = vmatprep.subr.mxu0 0.0
    %76 = vmatpush1.msra.mxu0 0.0
    %77 = vmatprep.subr.mxu0 0.0
    %78 = vmatpush1.msra.mxu0 0.0
    %79 = vmatprep.subr.mxu0 0.0
    %80 = vmatpush1.msra.mxu0 0.0
    %81 = vmatprep.subr.mxu0 0.0
    %82 = vmatpush1.msra.mxu0 0.0
    %83 = vmatprep.subr.mxu0 0.0
    %84 = vmatpush1.msra.mxu0 0.0
    %85 = vmatprep.subr.mxu0 0.0
    %86 = vmatpush1.msra.mxu0 0.0
    %87 = vmatprep.subr.mxu0 0.0
    %88 = vmatpush1.msra.mxu0 0.0
    %89 = vmatprep.subr.mxu0 0.0
    %90 = vmatpush1.msra.mxu0 0.0
    %91 = vmatprep.subr.mxu0 0.0
    %92 = vmatpush1.msra.mxu0 0.0
    %93 = vmatprep.subr.mxu0 0.0
    %94 = vmatpush1.msra.mxu0 0.0
    %95 = vmatprep.subr.mxu0 0.0
    %96 = vmatpush1.msra.mxu0 0.0
    %97 = vmatprep.subr.mxu0 0.0
    %98 = vmatpush1.msra.mxu0 0.0
    %99 = vmatprep.subr.mxu0 0.0
    %100 = vmatpush1.msra.mxu0 0.0
    %101 = vmatprep.subr.mxu0 0.0
    %102 = vmatpush1.msra.mxu0 0.0
    %103 = vmatprep.subr.mxu0 0.0
    %104 = vmatpush1.msra.mxu0 0.0
    %105 = vmatprep.subr.mxu0 0.0
    %106 = vmatpush1.msra.mxu0 0.0
    %107 = vmatprep.subr.mxu0 0.0
    %108 = vmatpush1.msra.mxu0 0.0
    %109 = vmatprep.subr.mxu0 0.0
    %110 = vmatpush1.msra.mxu0 0.0
    %111 = vmatprep.subr.mxu0 0.0
    %112 = vmatpush1.msra.mxu0 0.0
    %113 = vmatprep.mubr.f32.mxu0 0.0
    %114 = vmatmul.mubr.f32.gmra.mrb[0].mxu0 %v43
    %v115 = vpop.f32.mrb[0].mxu0
    %v116 = vadd.f32 %v39, %v115
    %v117 = vpop.f32.mrb[0].mxu0
    %118 = vdwg.mxu0
    %v119 = vmax.f32 %v116, 0.0
    %v120 = vld [vmem:[%s3] sm:$0xff]
    %v121 = vld [vmem:[%s4] sm:$0xff]
    %123 = vset.pattern.permute.xlu0 0
    %124 = vperm.xlu0 %123, %v121
    %v125 = vpop.permute.xlu0 %124
    %vm127 = vcmask 261120
    %v129 = vsel %vm127, %v120, 0
    %v132 = vsel %vm127, %v119, 0
    %134 = vmatprep.subr.mxu0 0.0
    %135 = vmatpush1.xpose.msra.mxu0 %v132
    %136 = vmatprep.subr.mxu0 0.0
    %137 = vmatpush1.xpose.msra.mxu0 0.0
    %138 = vmatprep.subr.mxu0 0.0
    %139 = vmatpush1.xpose.msra.mxu0 0.0
    %140 = vmatprep.subr.mxu0 0.0
    %141 = vmatpush1.xpose.msra.mxu0 0.0
    %142 = vmatprep.subr.mxu0 0.0
    %143 = vmatpush1.xpose.msra.mxu0 0.0
    %144 = vmatprep.subr.mxu0 0.0
    %145 = vmatpush1.xpose.msra.mxu0 0.0
    %146 = vmatprep.subr.mxu0 0.0
    %147 = vmatpush1.xpose.msra.mxu0 0.0
    %148 = vmatprep.subr.mxu0 0.0
    %149 = vmatpush1.xpose.msra.mxu0 0.0
    %150 = vmatprep.subr.mxu0 0.0
    %151 = vmatpush1.xpose.msra.mxu0 0.0
    %152 = vmatprep.subr.mxu0 0.0
    %153 = vmatpush1.xpose.msra.mxu0 0.0
    %154 = vmatprep.subr.mxu0 0.0
    %155 = vmatpush1.xpose.msra.mxu0 0.0
    %156 = vmatprep.subr.mxu0 0.0
    %157 = vmatpush1.xpose.msra.mxu0 0.0
    %158 = vmatprep.subr.mxu0 0.0
    %159 = vmatpush1.xpose.msra.mxu0 0.0
    %160 = vmatprep.subr.mxu0 0.0
    %161 = vmatpush1.xpose.msra.mxu0 0.0
    %162 = vmatprep.subr.mxu0 0.0
    %163 = vmatpush1.xpose.msra.mxu0 0.0
    %164 = vmatprep.subr.mxu0 0.0
    %165 = vmatpush1.xpose.msra.mxu0 0.0
    %166 = vmatprep.subr.mxu0 0.0
    %167 = vmatpush1.xpose.msra.mxu0 0.0
    %168 = vmatprep.subr.mxu0 0.0
    %169 = vmatpush1.xpose.msra.mxu0 0.0
    %170 = vmatprep.subr.mxu0 0.0
    %171 = vmatpush1.xpose.msra.mxu0 0.0
    %172 = vmatprep.subr.mxu0 0.0
    %173 = vmatpush1.xpose.msra.mxu0 0.0
    %174 = vmatprep.subr.mxu0 0.0
    %175 = vmatpush1.xpose.msra.mxu0 0.0
    %176 = vmatprep.subr.mxu0 0.0
    %177 = vmatpush1.xpose.msra.mxu0 0.0
    %178 = vmatprep.subr.mxu0 0.0
    %179 = vmatpush1.xpose.msra.mxu0 0.0
    %180 = vmatprep.subr.mxu0 0.0
    %181 = vmatpush1.xpose.msra.mxu0 0.0
    %182 = vmatprep.subr.mxu0 0.0
    %183 = vmatpush1.xpose.msra.mxu0 0.0
    %184 = vmatprep.subr.mxu0 0.0
    %185 = vmatpush1.xpose.msra.mxu0 0.0
    %186 = vmatprep.subr.mxu0 0.0
    %187 = vmatpush1.xpose.msra.mxu0 0.0
    %188 = vmatprep.subr.mxu0 0.0
    %189 = vmatpush1.xpose.msra.mxu0 0.0
    %190 = vmatprep.subr.mxu0 0.0
    %191 = vmatpush1.xpose.msra.mxu0 0.0
    %192 = vmatprep.subr.mxu0 0.0
    %193 = vmatpush1.xpose.msra.mxu0 0.0
    %194 = vmatprep.subr.mxu0 0.0
    %195 = vmatpush1.xpose.msra.mxu0 0.0
    %196 = vmatprep.subr.mxu0 0.0
    %197 = vmatpush1.xpose.msra.mxu0 0.0
    %198 = vmatprep.mubr.f32.mxu0 0.0
    %199 = vmatmul.mubr.f32.gmra.mrb[0].mxu0 %v129
    %v200 = vpop.f32.mrb[0].mxu0
    %v201 = vadd.f32 %v125, %v200
    %v202 = vpop.f32.mrb[0].mxu0
    %203 = vdwg.mxu0
    %v204 = vtanh.pop %v201
    %v205 = vmul.f32 %v204, 2.0
    %vm206 = vcmask 31744
    %207 = vst.msk [vmem:[%s5] sm:$0xff] %vm206, %v205
    // Predicated region
    $region26: #{tpu_custom_call.1} parent=1 // pred_check
      _
    $region27: #{tpu_custom_call.1} parent=1 // pred_check_branch
      %209 = sbr.rel (0) target = $region29
    $region28: #{tpu_custom_call.1} parent=1 // pred_region
      _
    $region29: #{tpu_custom_call.1} parent=1 // pred_fallthru
      _
    // Predicated region
    $region30: #{tpu_custom_call.1} parent=1 // pred_check
      _
    $region31: #{tpu_custom_call.1} parent=1 // pred_check_branch
      %211 = sbr.rel (0) target = $region33
    $region32: #{tpu_custom_call.1} parent=1 // pred_region
      _
    $region33: #{tpu_custom_call.1} parent=1 // pred_fallthru
      _
    %212 = vsyncpa [#allocation3], 1

</llo_original>
